<compile_context>
chip_gen: v5e
topology: v5e:2x2
jax: 0.10.0
libtpu: 0.0.40
codegen_flags: <defaults>
</compile_context>

<pallas_src>
import jax
import jax.numpy as jnp
from jax.experimental import pallas as pl
from jax.experimental.pallas import tpu as pltpu


def _specific_norm_kernel(scale_ref, bias_ref, x_ref, o_ref):
    # scale_ref / bias_ref : SMEM (C,) f32
    # x_ref / o_ref        : VMEM (C, R, L) dense (8,128)-tiled blocks
    C = x_ref.shape[0]
    for c in range(C):  # static unroll (C == 3): scalar-broadcast mul+add per plane
        o_ref[c] = (x_ref[c] * scale_ref[c] + bias_ref[c]).astype(o_ref.dtype)


def _round_up(v, m):
    return ((v + m - 1) // m) * m


def specific_norm(x, mean, std, donate_x=False):
    """Per-channel (x - mean[c]) / std[c]; same semantics as SpecificNorm.forward.

    x: (N, 3, H, W) float32; mean/std: (3,) float32.
    """
    N, C, H, W = x.shape
    HW = H * W

    # Fused normalization constants (f32): o = x * (1/std) + (-mean/std)
    scale = (1.0 / std).astype(jnp.float32)
    bias = (-mean / std).astype(jnp.float32)

    # ---- lane-dense 2-D view of the spatial axis: HW = R_total * L -------
    # L a multiple of 128 -> dense vreg packing, unmasked full-width stores.
    L = 0
    for cand in (4096, 2048, 1024, 512, 256, 128):
        if HW % cand == 0:
            L = cand
            break
    if L:
        R_total = HW // L
        x2 = x.reshape(N, C, R_total, L)  # contiguous NCHW plane -> free reshape
    else:
        # HW not 128-divisible: keep (H, W); lane dim = W (masked vst if W % 128).
        # TODO(synk): optional pad-to-128 path for odd resolutions (e.g. 250x250).
        L, R_total, x2 = W, H, x

    # ---- tile the row axis; each block carries all C channels ------------
    # ~2 MiB raw per block -> ~8 MiB pipelined (in+out, double-buffered),
    # safely under the scoped-VMEM default on v5e (16 MiB) / v6e / v7x (32 MiB).
    MAX_BLOCK_BYTES = 2 * 1024 * 1024
    bytes_per_row = C * L * x.dtype.itemsize
    max_rows = max(8, (MAX_BLOCK_BYTES // bytes_per_row) // 8 * 8)

    if R_total <= max_rows:
        R, n_tiles = R_total, 1
    else:
        R = max_rows
        n_tiles = pl.cdiv(R_total, R)

    # v7x megacore: avoid an odd, tiny grid (one TC idle) when splittable.
    if (N * n_tiles) % 2 == 1 and n_tiles == 1 and R_total > 8:
        R = _round_up(pl.cdiv(R_total, 2), 8)
        n_tiles = pl.cdiv(R_total, R)

    block = (None, C, R, L)  # batch dim squeezed out of the kernel view
    idx = lambda n, t: (n, 0, t, 0)

    extra = {}
    if donate_x:
        # x2 is input index 2 (after the two SMEM scalar vectors).
        extra["input_output_aliases"] = {2: 0}

    out = pl.pallas_call(
        _specific_norm_kernel,
        out_shape=jax.ShapeDtypeStruct(x2.shape, x.dtype),
        grid=(N, n_tiles),
        in_specs=[
            pl.BlockSpec(memory_space=pltpu.MemorySpace.SMEM),  # scale (C,)
            pl.BlockSpec(memory_space=pltpu.MemorySpace.SMEM),  # bias  (C,)
            pl.BlockSpec(block, idx),
        ],
        out_specs=pl.BlockSpec(block, idx),
        compiler_params=pltpu.CompilerParams(
            # every grid point independent -> fully parallel (2-TC sharding on v7x)
            dimension_semantics=("parallel", "parallel")
        ),
        **extra,
    )(scale, bias, x2)

    return out.reshape(N, C, H, W)


if __name__ == "__main__":
    key = jax.random.PRNGKey(0)
    N, C, H, W = 2, 3, 16, 16
    x = jax.random.uniform(key, (N, C, H, W), dtype=jnp.float32)

    # Deterministic ImageNet normalization constants (from the module's __init__)
    mean = jnp.array([0.485, 0.456, 0.406], dtype=jnp.float32)
    std = jnp.array([0.229, 0.224, 0.225], dtype=jnp.float32)

    out = specific_norm(x, mean, std)
    out = jax.block_until_ready(out)

    # Pure-JAX reference check (true divide; fused scale/bias matches to a few ulps)
    ref = (x - mean.reshape(1, 3, 1, 1)) / std.reshape(1, 3, 1, 1)
    assert out.shape == x.shape and out.dtype == x.dtype
    assert jnp.allclose(out, ref, atol=1e-5, rtol=1e-5)

    print("KERNEL_OK")
</pallas_src>

<mosaic_0001>
module attributes {stable_mosaic.version = 11 : i64} {
  func.func @_specific_norm_kernel(%arg0: i32, %arg1: i32, %arg2: memref<3xf32, #tpu.memory_space<smem>>, %arg3: memref<3xf32, #tpu.memory_space<smem>>, %arg4: memref<1x3x1x256xf32, #tpu.memory_space<vmem>>, %arg5: memref<1x3x1x256xf32, #tpu.memory_space<vmem>>) attributes {dimension_semantics = [#tpu.dimension_semantics<parallel>, #tpu.dimension_semantics<parallel>], iteration_bounds = array<i64: 2, 1>, scalar_prefetch = 0 : i64, scratch_operands = 0 : i64, tpu.core_type = #tpu.core_type<tc>, window_params = [{transform_indices = @transform_0, window_bounds = array<i64: 3>}, {transform_indices = @transform_1, window_bounds = array<i64: 3>}, {transform_indices = @transform_2, window_bounds = array<i64: 1, 3, 1, 256>}, {transform_indices = @transform_3, window_bounds = array<i64: 1, 3, 1, 256>}]} {
    %c0 = arith.constant 0 : index
    %c0_0 = arith.constant 0 : index
    %c0_1 = arith.constant 0 : index
    %c0_2 = arith.constant 0 : index
    %0 = vector.load %arg4[%c0, %c0_0, %c0_1, %c0_2] : memref<1x3x1x256xf32, #tpu.memory_space<vmem>>, vector<1x1x1x256xf32>
    %1 = vector.shape_cast %0 : vector<1x1x1x256xf32> to vector<1x256xf32>
    %c0_3 = arith.constant 0 : index
    %2 = memref.load %arg2[%c0_3] : memref<3xf32, #tpu.memory_space<smem>>
    %3 = vector.broadcast %2 : f32 to vector<1x256xf32>
    %4 = arith.mulf %1, %3 : vector<1x256xf32>
    %c0_4 = arith.constant 0 : index
    %5 = memref.load %arg3[%c0_4] : memref<3xf32, #tpu.memory_space<smem>>
    %6 = vector.broadcast %5 : f32 to vector<1x256xf32>
    %7 = arith.addf %4, %6 : vector<1x256xf32>
    %c0_5 = arith.constant 0 : index
    %c0_6 = arith.constant 0 : index
    %c0_7 = arith.constant 0 : index
    %c0_8 = arith.constant 0 : index
    %8 = vector.load %arg5[%c0_5, %c0_6, %c0_7, %c0_8] : memref<1x3x1x256xf32, #tpu.memory_space<vmem>>, vector<1x1x1x256xf32>
    %9 = vector.shape_cast %8 : vector<1x1x1x256xf32> to vector<1x256xf32>
    %10 = vector.shape_cast %7 : vector<1x256xf32> to vector<1x1x1x256xf32>
    tpu.vector_store %arg5[%c0_5, %c0_6, %c0_7, %c0_8], %10 {strides = array<i32>} : memref<1x3x1x256xf32, #tpu.memory_space<vmem>>, vector<1x1x1x256xf32>,
    %c0_9 = arith.constant 0 : index
    %c1 = arith.constant 1 : index
    %c0_10 = arith.constant 0 : index
    %c0_11 = arith.constant 0 : index
    %11 = vector.load %arg4[%c0_9, %c1, %c0_10, %c0_11] : memref<1x3x1x256xf32, #tpu.memory_space<vmem>>, vector<1x1x1x256xf32>
    %12 = vector.shape_cast %11 : vector<1x1x1x256xf32> to vector<1x256xf32>
    %c1_12 = arith.constant 1 : index
    %13 = memref.load %arg2[%c1_12] : memref<3xf32, #tpu.memory_space<smem>>
    %14 = vector.broadcast %13 : f32 to vector<1x256xf32>
    %15 = arith.mulf %12, %14 : vector<1x256xf32>
    %c1_13 = arith.constant 1 : index
    %16 = memref.load %arg3[%c1_13] : memref<3xf32, #tpu.memory_space<smem>>
    %17 = vector.broadcast %16 : f32 to vector<1x256xf32>
    %18 = arith.addf %15, %17 : vector<1x256xf32>
    %c0_14 = arith.constant 0 : index
    %c1_15 = arith.constant 1 : index
    %c0_16 = arith.constant 0 : index
    %c0_17 = arith.constant 0 : index
    %19 = vector.load %arg5[%c0_14, %c1_15, %c0_16, %c0_17] : memref<1x3x1x256xf32, #tpu.memory_space<vmem>>, vector<1x1x1x256xf32>
    %20 = vector.shape_cast %19 : vector<1x1x1x256xf32> to vector<1x256xf32>
    %21 = vector.shape_cast %18 : vector<1x256xf32> to vector<1x1x1x256xf32>
    tpu.vector_store %arg5[%c0_14, %c1_15, %c0_16, %c0_17], %21 {strides = array<i32>} : memref<1x3x1x256xf32, #tpu.memory_space<vmem>>, vector<1x1x1x256xf32>,
    %c0_18 = arith.constant 0 : index
    %c2 = arith.constant 2 : index
    %c0_19 = arith.constant 0 : index
    %c0_20 = arith.constant 0 : index
    %22 = vector.load %arg4[%c0_18, %c2, %c0_19, %c0_20] : memref<1x3x1x256xf32, #tpu.memory_space<vmem>>, vector<1x1x1x256xf32>
    %23 = vector.shape_cast %22 : vector<1x1x1x256xf32> to vector<1x256xf32>
    %c2_21 = arith.constant 2 : index
    %24 = memref.load %arg2[%c2_21] : memref<3xf32, #tpu.memory_space<smem>>
    %25 = vector.broadcast %24 : f32 to vector<1x256xf32>
    %26 = arith.mulf %23, %25 : vector<1x256xf32>
    %c2_22 = arith.constant 2 : index
    %27 = memref.load %arg3[%c2_22] : memref<3xf32, #tpu.memory_space<smem>>
    %28 = vector.broadcast %27 : f32 to vector<1x256xf32>
    %29 = arith.addf %26, %28 : vector<1x256xf32>
    %c0_23 = arith.constant 0 : index
    %c2_24 = arith.constant 2 : index
    %c0_25 = arith.constant 0 : index
    %c0_26 = arith.constant 0 : index
    %30 = vector.load %arg5[%c0_23, %c2_24, %c0_25, %c0_26] : memref<1x3x1x256xf32, #tpu.memory_space<vmem>>, vector<1x1x1x256xf32>
    %31 = vector.shape_cast %30 : vector<1x1x1x256xf32> to vector<1x256xf32>
    %32 = vector.shape_cast %29 : vector<1x256xf32> to vector<1x1x1x256xf32>
    tpu.vector_store %arg5[%c0_23, %c2_24, %c0_25, %c0_26], %32 {strides = array<i32>} : memref<1x3x1x256xf32, #tpu.memory_space<vmem>>, vector<1x1x1x256xf32>,
    return
  }
  func.func @transform_0(%arg0: i32, %arg1: i32) -> i32 {
    %c0_i32 = arith.constant 0 : i32
    %c0_i32_0 = arith.constant 0 : i32
    return %c0_i32 : i32
  }
  func.func @transform_1(%arg0: i32, %arg1: i32) -> i32 {
    %c0_i32 = arith.constant 0 : i32
    %c0_i32_0 = arith.constant 0 : i32
    return %c0_i32 : i32
  }
  func.func @transform_2(%arg0: i32, %arg1: i32) -> (i32, i32, i32, i32) {
    %c0_i32 = arith.constant 0 : i32
    %c0_i32_0 = arith.constant 0 : i32
    %c0_i32_1 = arith.constant 0 : i32
    return %arg0, %c0_i32, %arg1, %c0_i32_0 : i32, i32, i32, i32
  }
  func.func @transform_3(%arg0: i32, %arg1: i32) -> (i32, i32, i32, i32) {
    %c0_i32 = arith.constant 0 : i32
    %c0_i32_0 = arith.constant 0 : i32
    %c0_i32_1 = arith.constant 0 : i32
    return %arg0, %c0_i32, %arg1, %c0_i32_0 : i32, i32, i32, i32
  }
}

</mosaic_0001>

<llo_original>
// kernel: tpu_custom_call.1
$region0: #{tpu_custom_call.1}
  #allocation0 [shape = 'u32[]', space=smem, size = 0x4, offset = 0x4, fixed_abs, tag = 'smem constant byte address 0x4 - core index']
  #allocation1 [shape = 'u32[72,128]{1,0:T(1,128)}', space=vmem, size = 0x9000, scoped, tag = 'internal scratch']
  %s0 = inlined_call_operand.hbm [shape: f32[3], index: 0, kind: input, shape index: {}]
  %s1 = inlined_call_operand.hbm [shape: f32[3], index: 1, kind: input, shape index: {}]
  %s2 = inlined_call_operand.hbm [shape: f32[2,3,1,256], index: 2, kind: input, shape index: {}]
  %s3 = inlined_call_operand.hbm [shape: f32[2,3,1,256], index: 3, kind: output, shape index: {}]
  %s4 = sld [smem:[#allocation0]]
  $region57: #{tpu_custom_call.1} parent=0
    _
  %s6 = ssub.s32 1, %s4
  %s7 = scalar_select 0, %s6, %s4
  $region1: #{tpu_custom_call.1} parent=0
    #allocation2 [shape = 'u8[512]{0}', space=smem, size = 0x200, scoped, tag = 'input window, operand 0, single buffered']
    #allocation3 [shape = 's32[2]{0}', space=sflag, size = 0x8, scoped, tag = 'scoped memory for tpu_custom_call.1']
    #allocation4 [shape = 's32[2]{0}', space=sflag, size = 0x8, scoped, tag = 'scoped memory for tpu_custom_call.1']
    #allocation5 [shape = 's32[2]{0}', space=sflag, size = 0x8, scoped, tag = 'scoped memory for tpu_custom_call.1']
    #allocation6 [shape = 'u8[512]{0}', space=smem, size = 0x200, scoped, tag = 'input window, operand 1, single buffered']
    #allocation7 [shape = 's32[1]{0}', space=sflag, size = 0x4, scoped, tag = 'scoped memory for tpu_custom_call.1']
    #allocation8 [shape = 'u8[6144]{0}', space=vmem, size = 0x1800, scoped, tag = 'input window, operand 2']
    #allocation9 [shape = 'u8[6144]{0}', space=vmem, size = 0x1800, scoped, tag = 'output window, operand 0']
    %8 = vsyncpa [#allocation5], 0
    %9 = vsyncpa [#allocation7], 0
    %10 = vsyncpa [#allocation3], 0
    %s11 = scalar_lea.sflag [#allocation3], 1
    %12 = vsyncpa %s11, 0
    %13 = vsyncpa [#allocation4], 0
    %s14 = scalar_lea.sflag [#allocation4], 1
    %15 = vsyncpa %s14, 0
    loop: start=0, step=1, limit=4
    $region2: #{tpu_custom_call.1} parent=1 // loop_pre_header
      _
    $region3: #{tpu_custom_call.1} parent=1 // loop_header
      %s17 = sphi 0, %s21
      %p18 = scmp.ge.s32.totalorder %s17, 4
      %s24 = sphi 0, %s36
      %s25 = sphi 0, %s32
      %s26 = sphi 0, %s24
      %s27 = sphi 0, %s25
      %s28 = sphi 0, %s26
      %s29 = sphi 0, %s27
      %s37 = sphi 0, %s37
      %s39 = sphi 0, %s37
      %s40 = sphi 0, %s39
      %s54 = sphi 0, %s40
      %s58 = sphi 0, %s58
      %s60 = sphi 0, %s58
      %s61 = sphi 0, %s60
      %s75 = sphi 0, %s61
      %s83 = sphi 0, %s85
      %s86 = sphi 0, %s83
      %s87 = sphi 0, %s86
      %s103 = sphi 0, %s87
      %s111 = sphi 0, %s113
      %s114 = sphi 0, %s111
      %s115 = sphi 0, %s114
      %s131 = sphi 0, %s115
    $region4: #{tpu_custom_call.1} parent=1 // loop_header_branch
      %20 = sbr.rel (%p18) target = $region8
    $region5: #{tpu_custom_call.1} parent=1 // loop_body
      %s22 = ssub.s32 %s17, 1
      %s23 = ssub.s32 %s17, 2
      %s30 = sadd.s32 1, %s25
      %p31 = scmp.ge.s32.totalorder %s30, 1
      %s32 = scalar_select %p31, 0, %s30
      %s33 = sadd.s32 1, %s24
      %s34 = scalar_select %p31, %s33, %s24
      %p35 = scmp.ge.s32.totalorder %s34, 2
      %s36 = scalar_select %p35, 0, %s34
      %s38 = sadd.s32 %s37, 1
      %p41 = scmp.eq.s32.totalorder %s17, 1
      %p42 = scmp.ne.s32.totalorder %s37, %s39
      %p43 = scmp.eq.s32.totalorder %s17, 0
      %p44 = por %p42, %p43
      %p45 = scmp.ne.s32.totalorder %s37, %s39
      %p46 = scmp.eq.s32.totalorder %s22, 1
      %p47 = por %p45, %p46
      %p48 = scmp.ne.s32.totalorder %s39, %s40
      %p49 = scmp.eq.s32.totalorder %s22, 0
      %p50 = por %p48, %p49
      %p51 = scmp.ne.s32.totalorder %s39, %s40
      %p52 = scmp.eq.s32.totalorder %s23, 1
      %p53 = por %p51, %p52
      %p55 = scmp.ne.s32.totalorder %s40, %s54
      %p56 = scmp.eq.s32.totalorder %s23, 0
      %p57 = por %p55, %p56
      %s59 = sadd.s32 %s58, 1
      %p62 = scmp.eq.s32.totalorder %s17, 1
      %p63 = scmp.ne.s32.totalorder %s58, %s60
      %p64 = scmp.eq.s32.totalorder %s17, 0
      %p65 = por %p63, %p64
      %p66 = scmp.ne.s32.totalorder %s58, %s60
      %p67 = scmp.eq.s32.totalorder %s22, 1
      %p68 = por %p66, %p67
      %p69 = scmp.ne.s32.totalorder %s60, %s61
      %p70 = scmp.eq.s32.totalorder %s22, 0
      %p71 = por %p69, %p70
      %p72 = scmp.ne.s32.totalorder %s60, %s61
      %p73 = scmp.eq.s32.totalorder %s23, 1
      %p74 = por %p72, %p73
      %p76 = scmp.ne.s32.totalorder %s61, %s75
      %p77 = scmp.eq.s32.totalorder %s23, 0
      %p78 = por %p76, %p77
      %s79 = ssub.s32 %s24, %s36
      %s80 = ssub.s32 %s25, %s32
      %s81 = sor.u32 %s79, %s80
      %p82 = scmp.eq.s32.totalorder %s81, 0
      %s84 = sadd.s32 %s83, 1
      %s85 = scalar_select %p82, %s83, %s84
      %p88 = pneg %p82
      %p89 = scmp.eq.s32.totalorder %s17, 1
      %p90 = por %p88, %p89
      %p91 = scmp.ne.s32.totalorder %s83, %s86
      %p92 = scmp.eq.s32.totalorder %s17, 0
      %p93 = por %p91, %p92
      %p94 = scmp.ne.s32.totalorder %s83, %s86
      %p95 = scmp.eq.s32.totalorder %s22, 1
      %p96 = por %p94, %p95
      %p97 = scmp.ne.s32.totalorder %s86, %s87
      %p98 = scmp.eq.s32.totalorder %s22, 0
      %p99 = por %p97, %p98
      %p100 = scmp.ne.s32.totalorder %s86, %s87
      %p101 = scmp.eq.s32.totalorder %s23, 1
      %p102 = por %p100, %p101
      %p104 = scmp.ne.s32.totalorder %s87, %s103
      %p105 = scmp.eq.s32.totalorder %s23, 0
      %p106 = por %p104, %p105
      %s107 = ssub.s32 %s24, %s36
      %s108 = ssub.s32 %s25, %s32
      %s109 = sor.u32 %s107, %s108
      %p110 = scmp.eq.s32.totalorder %s109, 0
      %s112 = sadd.s32 %s111, 1
      %s113 = scalar_select %p110, %s111, %s112
      %p116 = pneg %p110
      %p117 = scmp.eq.s32.totalorder %s17, 1
      %p118 = por %p116, %p117
      %p119 = scmp.ne.s32.totalorder %s111, %s114
      %p120 = scmp.eq.s32.totalorder %s17, 0
      %p121 = por %p119, %p120
      %p122 = scmp.ne.s32.totalorder %s111, %s114
      %p123 = scmp.eq.s32.totalorder %s22, 1
      %p124 = por %p122, %p123
      %p125 = scmp.ne.s32.totalorder %s114, %s115
      %p126 = scmp.eq.s32.totalorder %s22, 0
      %p127 = por %p125, %p126
      %p128 = scmp.ne.s32.totalorder %s114, %s115
      %p129 = scmp.eq.s32.totalorder %s23, 1
      %p130 = por %p128, %p129
      %p132 = scmp.ne.s32.totalorder %s115, %s131
      %p133 = scmp.eq.s32.totalorder %s23, 0
      %p134 = por %p132, %p133
      %p135 = scmp.le.s32.totalorder 1, %s17
      %p136 = scmp.lt.s32.totalorder %s17, 3
      %p137 = pnand %p135, %p136
      %p138 = pneg %p137
      // Predicated region
      $region9: #{tpu_custom_call.1} parent=5 // pred_check
        _
      $region10: #{tpu_custom_call.1} parent=5 // pred_check_branch
        %140 = sbr.rel (%p137) target = $region12
      $region11: #{tpu_custom_call.1} parent=5 // pred_region
        %s141 = ssub.s32 %s17, 1
        // Predicated region
        $region13: #{tpu_custom_call.1} parent=11 // pred_check
          %p142 = pneg %p50
        $region14: #{tpu_custom_call.1} parent=11 // pred_check_branch
          %144 = sbr.rel (%p142) target = $region16
        $region15: #{tpu_custom_call.1} parent=11 // pred_region
          %146 = vsyncadd [#allocation5], 0
          %s148 = sshll.u32 %s0, 4
          %s149 = int_to_ptr.hbm [resolvable:$true] %s148
          %151 = dma.hbm_to_smem %s149, 16, [#allocation2], [#allocation5]
        $region16: #{tpu_custom_call.1} parent=11 // pred_fallthru
          _
        // Predicated region
        $region17: #{tpu_custom_call.1} parent=11 // pred_check
          %p152 = pneg %p71
        $region18: #{tpu_custom_call.1} parent=11 // pred_check_branch
          %154 = sbr.rel (%p152) target = $region20
        $region19: #{tpu_custom_call.1} parent=11 // pred_region
          %156 = vsyncadd [#allocation7], 0
          %s158 = sshll.u32 %s1, 4
          %s159 = int_to_ptr.hbm [resolvable:$true] %s158
          %161 = dma.hbm_to_smem %s159, 16, [#allocation6], [#allocation7]
        $region20: #{tpu_custom_call.1} parent=11 // pred_fallthru
          _
      $region12: #{tpu_custom_call.1} parent=5 // pred_fallthru
        _
      %p162 = scmp.lt.s32.totalorder %s17, 2
      // Predicated region
      $region21: #{tpu_custom_call.1} parent=5 // pred_check
        %p163 = pneg %p162
      $region22: #{tpu_custom_call.1} parent=5 // pred_check_branch
        %165 = sbr.rel (%p163) target = $region24
      $region23: #{tpu_custom_call.1} parent=5 // pred_region
        // Predicated region
        $region25: #{tpu_custom_call.1} parent=23 // pred_check
          %p166 = pneg %p93
        $region26: #{tpu_custom_call.1} parent=23 // pred_check_branch
          %168 = sbr.rel (%p166) target = $region28
        $region27: #{tpu_custom_call.1} parent=23 // pred_region
          %s169 = sand.u32 %s83, 1
          %s170 = scalar_lea.sflag [#allocation3], %s169
          %s171 = sand.u32 %s83, 1
          %s172 = smul.addr %s171, 6
          %s173 = scalar_lea.vmem [#allocation8], %s172
          %175 = vsyncadd %s170, 0
          %s176 = smul.addr %s25, 2
          %s177 = smul.addr %s24, 6
          %s178 = sadd.s32 %s176, %s177
          %s179 = scalar_lea.hbm %s2, %s178
          %s180 = sshll.u32 %s179, 4
          %s181 = int_to_ptr.hbm [resolvable:$true] %s180
          %s182 = sshll.u32 %s173, 4
          %s183 = int_to_ptr.vmem [resolvable:$true] %s182
          %188 = dma.hbm_to_vmem [thread:$0]  %s181, 96, %s183, %s170, 32, 32, 2
        $region28: #{tpu_custom_call.1} parent=23 // pred_fallthru
          _
      $region24: #{tpu_custom_call.1} parent=5 // pred_fallthru
        _
      %p189 = scmp.le.s32.totalorder 1, %s17
      %p190 = scmp.lt.s32.totalorder %s17, 3
      %p191 = pnand %p189, %p190
      %p192 = pneg %p191
      // Predicated region
      $region29: #{tpu_custom_call.1} parent=5 // pred_check
        _
      $region30: #{tpu_custom_call.1} parent=5 // pred_check_branch
        %194 = sbr.rel (%p191) target = $region32
      $region31: #{tpu_custom_call.1} parent=5 // pred_region
        %s195 = ssub.s32 %s17, 1
        // Predicated region
        $region33: #{tpu_custom_call.1} parent=31 // pred_check
          %p196 = pneg %p50
        $region34: #{tpu_custom_call.1} parent=31 // pred_check_branch
          %198 = sbr.rel (%p196) target = $region36
        $region35: #{tpu_custom_call.1} parent=31 // pred_region
          %200 = dma.done [#allocation5], 16
        $region36: #{tpu_custom_call.1} parent=31 // pred_fallthru
          _
        // Predicated region
        $region37: #{tpu_custom_call.1} parent=31 // pred_check
          %p201 = pneg %p71
        $region38: #{tpu_custom_call.1} parent=31 // pred_check_branch
          %203 = sbr.rel (%p201) target = $region40
        $region39: #{tpu_custom_call.1} parent=31 // pred_region
          %205 = dma.done [#allocation7], 16
        $region40: #{tpu_custom_call.1} parent=31 // pred_fallthru
          _
        %s206 = sand.u32 %s86, 1
        %s207 = scalar_lea.sflag [#allocation3], %s206
        %s208 = sand.u32 %s86, 1
        %s209 = smul.addr %s208, 6
        %s210 = scalar_lea.vmem [#allocation8], %s209
        // Predicated region
        $region41: #{tpu_custom_call.1} parent=31 // pred_check
          %p211 = pneg %p99
        $region42: #{tpu_custom_call.1} parent=31 // pred_check_branch
          %213 = sbr.rel (%p211) target = $region44
        $region43: #{tpu_custom_call.1} parent=31 // pred_region
          %215 = dma.done %s207, 96
        $region44: #{tpu_custom_call.1} parent=31 // pred_fallthru
          _
        %216 = sfence
        %p217 = pneg %p50
        %p218 = pneg %p47
        %p219 = pneg %p71
        %p220 = pneg %p68
        %s221 = sand.u32 %s86, 1
        %s222 = scalar_lea.sflag [#allocation3], %s221
        %s223 = sand.u32 %s86, 1
        %s224 = smul.addr %s223, 6
        %s225 = scalar_lea.vmem [#allocation8], %s224
        %p226 = pneg %p99
        %p227 = pneg %p96
        %p228 = pneg %p127
        %p229 = pneg %p124
        %s230 = sand.u32 %s114, 1
        %s231 = scalar_lea.sflag [#allocation4], %s230
        %s232 = sand.u32 %s114, 1
        %s233 = smul.addr %s232, 6
        %s234 = scalar_lea.vmem [#allocation9], %s233
        %v235 = vld [vmem:[%s210] sm:$0x3]
        %s236 = sld [smem:[#allocation2]]
        %v237 = vstv %s236
        %v238 = vmul.f32 %v235, %v237
        %s239 = sld [smem:[#allocation6]]
        %v240 = vstv %s239
        %v241 = vadd.f32 %v238, %v240
        %v242 = vlaneseq
        %vm243 = vcmp.ge.s32.totalorder %v242, 0
        %vm244 = vcmp.lt.s32.totalorder %v242, 256
        %vm245 = vmand %vm243, %vm244
        %246 = vst.msk [vmem:[%s234] sm:$0x3] %vm245, %v241
        %s247 = scalar_lea.vmem %s210, 2 [#allocation8]
        %v248 = vld [vmem:[%s247] sm:$0x3]
        %s249 = sld [smem:[#allocation2 + $0x1]]
        %v250 = vstv %s249
        %v251 = vmul.f32 %v248, %v250
        %s252 = sld [smem:[#allocation6 + $0x1]]
        %v253 = vstv %s252
        %v254 = vadd.f32 %v251, %v253
        %s255 = scalar_lea.vmem %s234, 2 [#allocation9]
        %256 = vst.msk [vmem:[%s255] sm:$0x3] %vm245, %v254
        %s257 = scalar_lea.vmem %s210, 4 [#allocation8]
        %v258 = vld [vmem:[%s257] sm:$0x3]
        %s259 = sld [smem:[#allocation2 + $0x2]]
        %v260 = vstv %s259
        %v261 = vmul.f32 %v258, %v260
        %s262 = sld [smem:[#allocation6 + $0x2]]
        %v263 = vstv %s262
        %v264 = vadd.f32 %v261, %v263
        %s265 = scalar_lea.vmem %s234, 4 [#allocation9]
        %266 = vst.msk [vmem:[%s265] sm:$0x3] %vm245, %v264
        %s267 = sand.u32 %s114, 1
        %s268 = scalar_lea.sflag [#allocation4], %s267
        %s269 = sand.u32 %s114, 1
        %s270 = smul.addr %s269, 6
        %s271 = scalar_lea.vmem [#allocation9], %s270
        // Predicated region
        $region45: #{tpu_custom_call.1} parent=31 // pred_check
          %p272 = pneg %p124
        $region46: #{tpu_custom_call.1} parent=31 // pred_check_branch
          %274 = sbr.rel (%p272) target = $region48
        $region47: #{tpu_custom_call.1} parent=31 // pred_region
          %276 = vsyncadd %s268, 0
          %s277 = smul.addr %s27, 2
          %s278 = smul.addr %s26, 6
          %s279 = sadd.s32 %s277, %s278
          %s280 = scalar_lea.hbm %s3, %s279
          %s281 = sshll.u32 %s271, 4
          %s282 = int_to_ptr.vmem [resolvable:$true] %s281
          %s283 = sshll.u32 %s280, 4
          %s284 = int_to_ptr.hbm [resolvable:$true] %s283
          %289 = dma.vmem_to_hbm [thread:$0]  %s282, 96, %s284, %s268, 32, 32, 2
        $region48: #{tpu_custom_call.1} parent=31 // pred_fallthru
          _
      $region32: #{tpu_custom_call.1} parent=5 // pred_fallthru
        _
      %p290 = scmp.le.s32.totalorder 2, %s17
      // Predicated region
      $region49: #{tpu_custom_call.1} parent=5 // pred_check
        %p291 = pneg %p290
      $region50: #{tpu_custom_call.1} parent=5 // pred_check_branch
        %293 = sbr.rel (%p291) target = $region52
      $region51: #{tpu_custom_call.1} parent=5 // pred_region
        %s294 = ssub.s32 %s17, 2
        // Predicated region
        $region53: #{tpu_custom_call.1} parent=51 // pred_check
          %p295 = pneg %p130
        $region54: #{tpu_custom_call.1} parent=51 // pred_check_branch
          %297 = sbr.rel (%p295) target = $region56
        $region55: #{tpu_custom_call.1} parent=51 // pred_region
          %s298 = sand.u32 %s115, 1
          %s299 = scalar_lea.sflag [#allocation4], %s298
          %s300 = sand.u32 %s115, 1
          %s301 = smul.addr %s300, 6
          %s302 = scalar_lea.vmem [#allocation9], %s301
          %304 = dma.done %s299, 96
        $region56: #{tpu_custom_call.1} parent=51 // pred_fallthru
          _
      $region52: #{tpu_custom_call.1} parent=5 // pred_fallthru
        _
    $region6: #{tpu_custom_call.1} parent=1 // loop_footer
      %s21 = sadd.s32 1, %s17
    $region7: #{tpu_custom_call.1} parent=1 // loop_footer_branch
      %16 = sbr.rel target = $region3
    $region8: #{tpu_custom_call.1} parent=1 // loop_exit
      _
    %305 = vsyncpa [#allocation3], 1
    %s306 = scalar_lea.sflag [#allocation3], 1
    %307 = vsyncpa %s306, 1
    %308 = vsyncpa [#allocation4], 1
    %s309 = scalar_lea.sflag [#allocation4], 1
    %310 = vsyncpa %s309, 1
    %311 = vsyncpa [#allocation5], 1
    %s312 = scalar_lea.sflag [#allocation5], 1
    %313 = vsyncpa %s312, 1
    %314 = vsyncpa [#allocation7], 1

</llo_original>
